<compile_context>
chip_gen: v7x
topology: tpu7x:2x2x1
jax: 0.10.0
libtpu: 0.0.40
codegen_flags: <defaults>
</compile_context>

<pallas_src>
import functools

import jax
import jax.numpy as jnp
from jax.experimental import pallas as pl
from jax.experimental.pallas import tpu as pltpu

LN_EPS = 1e-5  # torch.nn.LayerNorm default eps


def _round_up(a: int, b: int) -> int:
    return ((a + b - 1) // b) * b


def _vmem_capacity_bytes() -> int:
    try:
        return int(pltpu.get_tpu_info().vmem_capacity_bytes)
    except Exception:
        return 64 * 1024 * 1024  # conservative (v7x); v5e/v6e have 128 MiB


def _vmem_estimate(tm, tk, dout_p, out_itemsize, w_bufs, need_acc):
    """Rough per-step VMEM footprint of the pipelined kernel."""
    x_b = 2 * tm * tk * 2                       # bf16 x tile, double-buffered
    w_b = w_bufs * tk * dout_p * 2              # bf16 W slab (1 buf if invariant)
    o_b = 2 * tm * dout_p * out_itemsize        # output tile, double-buffered
    acc = tm * dout_p * 4 if need_acc else 0    # f32 scratch (bf16 output only)
    params = 2 * 3 * dout_p * 4                 # bias / gamma / beta (f32)
    return x_b + w_b + o_b + acc + params


def _general_layer_kernel(x_ref, w_ref, b_ref, gamma_ref, beta_ref, o_ref,
                          *acc_scratch, inv_dim_out, ln_eps, bf16_epilogue):
    # When the output dtype is f32 the output block itself is the accumulator
    # (its block index is invariant over k, so it stays resident in VMEM).
    acc_ref = acc_scratch[0] if acc_scratch else o_ref
    k = pl.program_id(1)

    @pl.when(k == 0)
    def _init():
        # Bias folded into the accumulator init (removes one epilogue VPU pass).
        acc_ref[...] = jnp.broadcast_to(b_ref[...], acc_ref.shape)

    # Linear (MXU): bf16 operands, f32 accumulation.
    acc_ref[...] += jnp.dot(x_ref[...], w_ref[...],
                            preferred_element_type=jnp.float32)

    @pl.when(k == pl.num_programs(1) - 1)
    def _epilogue():
        y = acc_ref[...]                                  # f32 (tm, dout_p)
        # One-pass LayerNorm stats over the *real* dim_out: padded feature
        # columns of y are exactly zero (zero W columns + zero bias), so the
        # sums over the 128-lane-padded slab equal sums over dim_out.
        mean = jnp.sum(y, axis=-1, keepdims=True) * inv_dim_out
        mean_sq = jnp.sum(y * y, axis=-1, keepdims=True) * inv_dim_out
        var = jnp.maximum(mean_sq - mean * mean, 0.0)
        y = (y - mean) * jax.lax.rsqrt(var + ln_eps)
        if bf16_epilogue:
            # v6e/v7x VPUs run bf16 at 2x packing; affine + ReLU in bf16.
            y = y.astype(jnp.bfloat16)
            y = (y * gamma_ref[...].astype(jnp.bfloat16)
                 + beta_ref[...].astype(jnp.bfloat16))
            o_ref[...] = jnp.maximum(y, 0).astype(o_ref.dtype)
        else:
            y = y * gamma_ref[...] + beta_ref[...]        # padded gamma/beta = 0
            o_ref[...] = jnp.maximum(y, 0.0).astype(o_ref.dtype)   # ReLU


def general_layer(x, w, b, gamma, beta, *, out_dtype=None, tm=None):
    """Fused Linear(+bias) -> LayerNorm -> ReLU (GeneralLayer forward).

    x: [N, dim_in], w: [dim_in, dim_out], b/gamma/beta: [dim_out] or [1, dim_out].
    Returns [N, dim_out] in out_dtype (default x.dtype). Pass
    out_dtype=jnp.bfloat16 when feeding the next layer's bf16 matmul.
    """
    N, dim_in = x.shape
    k_w, dim_out = w.shape
    assert k_w == dim_in
    out_dtype = jnp.dtype(x.dtype if out_dtype is None else out_dtype)
    out_itemsize = out_dtype.itemsize
    acc_in_out = out_dtype == jnp.dtype(jnp.float32)
    bf16_epilogue = out_dtype == jnp.dtype(jnp.bfloat16)

    # Generation-aware VMEM budget (128 MiB on v5e/v6e, 64 MiB on v7x).
    vmem_cap = _vmem_capacity_bytes()
    budget = int(vmem_cap * 0.70)
    vmem_limit = int(vmem_cap * 0.85)

    # bf16 MXU operands (f32 accumulation); bias / LN params stay f32
    # (epilogue stats run in f32; v5e VPU has no native bf16 path).
    x_bf = x.astype(jnp.bfloat16)
    w_bf = w.astype(jnp.bfloat16)
    b_f = jnp.asarray(b, jnp.float32).reshape(1, -1)
    g_f = jnp.asarray(gamma, jnp.float32).reshape(1, -1)
    bt_f = jnp.asarray(beta, jnp.float32).reshape(1, -1)

    # Lane-dense feature dim, 128-aligned K (full-width MXU passes even for
    # ragged dim_in; padded W rows are zero so results are unchanged).
    dout_p = _round_up(dim_out, 128)
    din_128 = _round_up(dim_in, 128)

    # K tiling from the actual bf16 W footprint: prefer full-W residency
    # (grid-invariant W block, fetched from HBM exactly once).
    if din_128 * dout_p * 2 <= budget // 3:
        tk = din_p = din_128
    else:
        tk = 2048
        while tk > 128 and 2 * tk * dout_p * 2 > budget // 3:
            tk //= 2
        tk = max(tk, 128)
        din_p = _round_up(dim_in, tk)
    grid_k = din_p // tk
    w_bufs = 1 if grid_k == 1 else 2

    # Row tile: as large as the VMEM budget allows, balanced across >= 2 row
    # tiles (when N allows) so the 'parallel' axis can shard over v7x's two
    # TensorCores. Rows are NOT padded; the partial last block is masked.
    if tm is None:
        tm_cap = 1024
        while tm_cap > 16 and _vmem_estimate(tm_cap, tk, dout_p, out_itemsize,
                                             w_bufs, not acc_in_out) > budget:
            tm_cap //= 2
        tm_cap = max(tm_cap, 16)
        n_tiles = max(pl.cdiv(N, tm_cap), 2 if N > 16 else 1)
        tm = min(tm_cap, max(16, _round_up(pl.cdiv(N, n_tiles), 16)))
    else:
        tm = max(16, _round_up(tm, 16))
    grid_m = pl.cdiv(N, tm)

    # Zero-pad only where needed: K of x (so padded-K contributions are
    # exactly zero, never NaN), features of W / params. No row padding of x.
    x_p = x_bf if din_p == dim_in else jnp.pad(x_bf, ((0, 0), (0, din_p - dim_in)))
    if din_p != dim_in or dout_p != dim_out:
        w_p = jnp.pad(w_bf, ((0, din_p - dim_in), (0, dout_p - dim_out)))
    else:
        w_p = w_bf
    if dout_p != dim_out:
        pad_f = ((0, 0), (0, dout_p - dim_out))
        b_p, g_p, bt_p = jnp.pad(b_f, pad_f), jnp.pad(g_f, pad_f), jnp.pad(bt_f, pad_f)
    else:
        b_p, g_p, bt_p = b_f, g_f, bt_f

    kernel = functools.partial(_general_layer_kernel,
                               inv_dim_out=1.0 / dim_out, ln_eps=LN_EPS,
                               bf16_epilogue=bf16_epilogue)

    cost = pl.CostEstimate(
        flops=int(2 * N * dim_in * dim_out),
        transcendentals=int(N),  # one rsqrt per row
        bytes_accessed=int(N * dim_in * 2 + dim_in * dim_out * 2
                           + N * dim_out * out_itemsize + 3 * dim_out * 4),
    )

    scratch = [] if acc_in_out else [pltpu.VMEM((tm, dout_p), jnp.float32)]

    def build(single_buffer_invariants):
        def spec(shape, index_map, invariant=False):
            if invariant and single_buffer_invariants:
                # Grid-invariant block: double-buffering buys nothing.
                return pl.BlockSpec(shape, index_map,
                                    pipeline_mode=pl.Buffered(1))
            return pl.BlockSpec(shape, index_map)

        return pl.pallas_call(
            kernel,
            out_shape=jax.ShapeDtypeStruct((N, dout_p), out_dtype),
            grid_spec=pltpu.PrefetchScalarGridSpec(
                num_scalar_prefetch=0,
                grid=(grid_m, grid_k),
                in_specs=[
                    spec((tm, tk), lambda i, k: (i, k)),              # x tile
                    spec((tk, dout_p), lambda i, k: (k, 0),           # W slab
                         invariant=(grid_k == 1)),
                    spec((1, dout_p), lambda i, k: (0, 0), True),     # bias
                    spec((1, dout_p), lambda i, k: (0, 0), True),     # gamma
                    spec((1, dout_p), lambda i, k: (0, 0), True),     # beta
                ],
                out_specs=pl.BlockSpec((tm, dout_p), lambda i, k: (i, 0)),
                scratch_shapes=scratch,
            ),
            compiler_params=pltpu.CompilerParams(
                dimension_semantics=("parallel", "arbitrary"),
                vmem_limit_bytes=vmem_limit,
            ),
            cost_estimate=cost,
        )

    try:
        out_padded = build(True)(x_p, w_p, b_p, g_p, bt_p)
    except Exception:
        # Fallback if the deployed Pallas version rejects pl.Buffered(1).
        out_padded = build(False)(x_p, w_p, b_p, g_p, bt_p)

    return out_padded[:, :dim_out]


def reference(x, w, b, gamma, beta):
    # Mirrors the kernel's numerics: bf16-rounded matmul operands, f32 math.
    xb = x.astype(jnp.bfloat16).astype(jnp.float32)
    wb = w.astype(jnp.bfloat16).astype(jnp.float32)
    y = xb @ wb + b
    mean = jnp.mean(y, axis=-1, keepdims=True)
    var = jnp.mean((y - mean) ** 2, axis=-1, keepdims=True)
    y = (y - mean) * jax.lax.rsqrt(var + LN_EPS)
    y = y * gamma + beta
    return jnp.maximum(y, 0.0)


if __name__ == "__main__":
    # Small shapes: N=8 nodes, dim_in=32, dim_out=32
    N, dim_in, dim_out = 8, 32, 32

    key = jax.random.PRNGKey(0)
    kx, kw, kb = jax.random.split(key, 3)

    x = jax.random.normal(kx, (N, dim_in), dtype=jnp.float32)

    # Deterministic parameter init (Linear weight/bias, LayerNorm affine)
    w = (jax.random.normal(kw, (dim_in, dim_out), dtype=jnp.float32)
         / jnp.sqrt(jnp.float32(dim_in)))
    b = 0.01 * jax.random.normal(kb, (1, dim_out), dtype=jnp.float32)
    gamma = jnp.ones((1, dim_out), dtype=jnp.float32)   # torch LN init
    beta = jnp.zeros((1, dim_out), dtype=jnp.float32)

    out = general_layer(x, w, b, gamma, beta)
    out = jax.block_until_ready(out)

    ref = reference(x, w, b, gamma, beta)
    assert out.shape == (N, dim_out)
    assert jnp.allclose(out, ref, atol=5e-3, rtol=5e-3), "mismatch vs reference"

    print("KERNEL_OK")
</pallas_src>

<mosaic_0001>
module attributes {stable_mosaic.version = 11 : i64} {
  func.func @_general_layer_kernel(%arg0: i32, %arg1: i32, %arg2: memref<16x128xbf16, #tpu.memory_space<vmem>>, %arg3: memref<128x128xbf16, #tpu.memory_space<vmem>>, %arg4: memref<1x128xf32, #tpu.memory_space<vmem>>, %arg5: memref<1x128xf32, #tpu.memory_space<vmem>>, %arg6: memref<1x128xf32, #tpu.memory_space<vmem>>, %arg7: memref<16x128xf32, #tpu.memory_space<vmem>>) attributes {dimension_semantics = [#tpu.dimension_semantics<parallel>, #tpu.dimension_semantics<arbitrary>], iteration_bounds = array<i64: 1, 1>, scalar_prefetch = 0 : i64, scratch_operands = 0 : i64, tpu.core_type = #tpu.core_type<tc>, window_params = [{transform_indices = @transform_0, window_bounds = array<i64: 16, 128>}, {pipeline_mode = #tpu.pipeline_mode<synchronous>, transform_indices = @transform_1, window_bounds = array<i64: 128, 128>}, {pipeline_mode = #tpu.pipeline_mode<synchronous>, transform_indices = @transform_2, window_bounds = array<i64: 1, 128>}, {pipeline_mode = #tpu.pipeline_mode<synchronous>, transform_indices = @transform_3, window_bounds = array<i64: 1, 128>}, {pipeline_mode = #tpu.pipeline_mode<synchronous>, transform_indices = @transform_4, window_bounds = array<i64: 1, 128>}, {transform_indices = @transform_5, window_bounds = array<i64: 16, 128>}]} {
    %c0_i32 = arith.constant 0 : i32
    %0 = arith.cmpi eq, %arg1, %c0_i32 : i32
    %1 = arith.extui %0 : i1 to i32
    %c0_i32_0 = arith.constant 0 : i32
    %2 = arith.cmpi ne, %1, %c0_i32_0 : i32
    scf.if %2 {
      %c0_10 = arith.constant 0 : index
      %c0_11 = arith.constant 0 : index
      %12 = vector.load %arg4[%c0_10, %c0_11] : memref<1x128xf32, #tpu.memory_space<vmem>>, vector<1x128xf32>
      %13 = vector.shape_cast %12 : vector<1x128xf32> to vector<1x128xf32>
      %14 = vector.broadcast %13 : vector<1x128xf32> to vector<16x128xf32>
      %c0_12 = arith.constant 0 : index
      %c0_13 = arith.constant 0 : index
      %15 = vector.load %arg7[%c0_12, %c0_13] : memref<16x128xf32, #tpu.memory_space<vmem>>, vector<16x128xf32>
      tpu.vector_store %arg7[%c0_12, %c0_13], %14 {strides = array<i32>} : memref<16x128xf32, #tpu.memory_space<vmem>>, vector<16x128xf32>,
    } else {
    }
    %c0 = arith.constant 0 : index
    %c0_1 = arith.constant 0 : index
    %3 = vector.load %arg7[%c0, %c0_1] : memref<16x128xf32, #tpu.memory_space<vmem>>, vector<16x128xf32>
    %c0_2 = arith.constant 0 : index
    %c0_3 = arith.constant 0 : index
    %4 = vector.load %arg2[%c0_2, %c0_3] : memref<16x128xbf16, #tpu.memory_space<vmem>>, vector<16x128xbf16>
    %c0_4 = arith.constant 0 : index
    %c0_5 = arith.constant 0 : index
    %5 = vector.load %arg3[%c0_4, %c0_5] : memref<128x128xbf16, #tpu.memory_space<vmem>>, vector<128x128xbf16>
    %cst = arith.constant dense<0.000000e+00> : vector<16x128xf32>
    %6 = tpu.matmul %4, %5, %cst {dimension_numbers = #tpu.dot_dimension_numbers<[1], [0], [0], [1], [0, 0, 1, 1], [], []>} : vector<16x128xbf16>, vector<128x128xbf16>, vector<16x128xf32> -> vector<16x128xf32>
    %7 = arith.addf %3, %6 : vector<16x128xf32>
    %c0_6 = arith.constant 0 : index
    %c0_7 = arith.constant 0 : index
    %8 = vector.load %arg7[%c0_6, %c0_7] : memref<16x128xf32, #tpu.memory_space<vmem>>, vector<16x128xf32>
    tpu.vector_store %arg7[%c0_6, %c0_7], %7 {strides = array<i32>} : memref<16x128xf32, #tpu.memory_space<vmem>>, vector<16x128xf32>,
    %c0_i32_8 = arith.constant 0 : i32
    %9 = arith.cmpi eq, %arg1, %c0_i32_8 : i32
    %10 = arith.extui %9 : i1 to i32
    %c0_i32_9 = arith.constant 0 : i32
    %11 = arith.cmpi ne, %10, %c0_i32_9 : i32
    scf.if %11 {
      %c0_10 = arith.constant 0 : index
      %c0_11 = arith.constant 0 : index
      %12 = vector.load %arg7[%c0_10, %c0_11] : memref<16x128xf32, #tpu.memory_space<vmem>>, vector<16x128xf32>
      %cst_12 = arith.constant dense<0.000000e+00> : vector<16xf32>
      %13 = vector.multi_reduction <add>, %12, %cst_12 [1] : vector<16x128xf32> to vector<16xf32>
      %14 = vector.shape_cast %13 : vector<16xf32> to vector<16x1xf32>
      %cst_13 = arith.constant 3.125000e-02 : f32
      %15 = vector.broadcast %cst_13 : f32 to vector<16x1xf32>
      %16 = arith.mulf %14, %15 : vector<16x1xf32>
      %17 = arith.mulf %12, %12 : vector<16x128xf32>
      %cst_14 = arith.constant dense<0.000000e+00> : vector<16xf32>
      %18 = vector.multi_reduction <add>, %17, %cst_14 [1] : vector<16x128xf32> to vector<16xf32>
      %19 = vector.shape_cast %18 : vector<16xf32> to vector<16x1xf32>
      %cst_15 = arith.constant 3.125000e-02 : f32
      %20 = vector.broadcast %cst_15 : f32 to vector<16x1xf32>
      %21 = arith.mulf %19, %20 : vector<16x1xf32>
      %22 = arith.mulf %16, %16 : vector<16x1xf32>
      %23 = arith.subf %21, %22 : vector<16x1xf32>
      %cst_16 = arith.constant 0.000000e+00 : f32
      %24 = vector.broadcast %cst_16 : f32 to vector<16x1xf32>
      %25 = arith.maximumf %23, %24 : vector<16x1xf32>
      %26 = vector.broadcast %16 : vector<16x1xf32> to vector<16x128xf32>
      %27 = arith.subf %12, %26 : vector<16x128xf32>
      %cst_17 = arith.constant 9.99999974E-6 : f32
      %28 = vector.broadcast %cst_17 : f32 to vector<16x1xf32>
      %29 = arith.addf %25, %28 : vector<16x1xf32>
      %30 = math.rsqrt %29 : vector<16x1xf32>
      %31 = vector.broadcast %30 : vector<16x1xf32> to vector<16x128xf32>
      %32 = arith.mulf %27, %31 : vector<16x128xf32>
      %c0_18 = arith.constant 0 : index
      %c0_19 = arith.constant 0 : index
      %33 = vector.load %arg5[%c0_18, %c0_19] : memref<1x128xf32, #tpu.memory_space<vmem>>, vector<1x128xf32>
      %34 = vector.broadcast %33 : vector<1x128xf32> to vector<16x128xf32>
      %35 = arith.mulf %32, %34 : vector<16x128xf32>
      %c0_20 = arith.constant 0 : index
      %c0_21 = arith.constant 0 : index
      %36 = vector.load %arg6[%c0_20, %c0_21] : memref<1x128xf32, #tpu.memory_space<vmem>>, vector<1x128xf32>
      %37 = vector.broadcast %36 : vector<1x128xf32> to vector<16x128xf32>
      %38 = arith.addf %35, %37 : vector<16x128xf32>
      %cst_22 = arith.constant 0.000000e+00 : f32
      %39 = vector.broadcast %cst_22 : f32 to vector<16x128xf32>
      %40 = arith.maximumf %38, %39 : vector<16x128xf32>
      %c0_23 = arith.constant 0 : index
      %c0_24 = arith.constant 0 : index
      %41 = vector.load %arg7[%c0_23, %c0_24] : memref<16x128xf32, #tpu.memory_space<vmem>>, vector<16x128xf32>
      tpu.vector_store %arg7[%c0_23, %c0_24], %40 {strides = array<i32>} : memref<16x128xf32, #tpu.memory_space<vmem>>, vector<16x128xf32>,
    } else {
    }
    return
  }
  func.func @transform_0(%arg0: i32, %arg1: i32) -> (i32, i32) {
    %c0_i32 = arith.constant 0 : i32
    return %arg0, %arg1 : i32, i32
  }
  func.func @transform_1(%arg0: i32, %arg1: i32) -> (i32, i32) {
    %c0_i32 = arith.constant 0 : i32
    %c0_i32_0 = arith.constant 0 : i32
    return %arg1, %c0_i32 : i32, i32
  }
  func.func @transform_2(%arg0: i32, %arg1: i32) -> (i32, i32) {
    %c0_i32 = arith.constant 0 : i32
    %c0_i32_0 = arith.constant 0 : i32
    %c0_i32_1 = arith.constant 0 : i32
    return %c0_i32, %c0_i32_0 : i32, i32
  }
  func.func @transform_3(%arg0: i32, %arg1: i32) -> (i32, i32) {
    %c0_i32 = arith.constant 0 : i32
    %c0_i32_0 = arith.constant 0 : i32
    %c0_i32_1 = arith.constant 0 : i32
    return %c0_i32, %c0_i32_0 : i32, i32
  }
  func.func @transform_4(%arg0: i32, %arg1: i32) -> (i32, i32) {
    %c0_i32 = arith.constant 0 : i32
    %c0_i32_0 = arith.constant 0 : i32
    %c0_i32_1 = arith.constant 0 : i32
    return %c0_i32, %c0_i32_0 : i32, i32
  }
  func.func @transform_5(%arg0: i32, %arg1: i32) -> (i32, i32) {
    %c0_i32 = arith.constant 0 : i32
    %c0_i32_0 = arith.constant 0 : i32
    return %arg0, %c0_i32 : i32, i32
  }
}

module attributes {stable_mosaic.version = 11 : i64} {
  func.func @_general_layer_kernel(%arg0: i32, %arg1: i32, %arg2: memref<16x128xbf16, #tpu.memory_space<vmem>>, %arg3: memref<128x128xbf16, #tpu.memory_space<vmem>>, %arg4: memref<1x128xf32, #tpu.memory_space<vmem>>, %arg5: memref<1x128xf32, #tpu.memory_space<vmem>>, %arg6: memref<1x128xf32, #tpu.memory_space<vmem>>, %arg7: memref<16x128xf32, #tpu.memory_space<vmem>>) attributes {dimension_semantics = [#tpu.dimension_semantics<parallel>, #tpu.dimension_semantics<arbitrary>], iteration_bounds = array<i64: 1, 1>, scalar_prefetch = 0 : i64, scratch_operands = 0 : i64, tpu.core_type = #tpu.core_type<tc>, window_params = [{transform_indices = @transform_0, window_bounds = array<i64: 16, 128>}, {transform_indices = @transform_1, window_bounds = array<i64: 128, 128>}, {pipeline_mode = #tpu.pipeline_mode<synchronous>, transform_indices = @transform_2, window_bounds = array<i64: 1, 128>}, {pipeline_mode = #tpu.pipeline_mode<synchronous>, transform_indices = @transform_3, window_bounds = array<i64: 1, 128>}, {pipeline_mode = #tpu.pipeline_mode<synchronous>, transform_indices = @transform_4, window_bounds = array<i64: 1, 128>}, {transform_indices = @transform_5, window_bounds = array<i64: 16, 128>}]} {
    %c0_i32 = arith.constant 0 : i32
    %0 = arith.cmpi eq, %arg1, %c0_i32 : i32
    %1 = arith.extui %0 : i1 to i32
    %c0_i32_0 = arith.constant 0 : i32
    %2 = arith.cmpi ne, %1, %c0_i32_0 : i32
    scf.if %2 {
      %c0_10 = arith.constant 0 : index
      %c0_11 = arith.constant 0 : index
      %12 = vector.load %arg4[%c0_10, %c0_11] : memref<1x128xf32, #tpu.memory_space<vmem>>, vector<1x128xf32>
      %13 = vector.shape_cast %12 : vector<1x128xf32> to vector<1x128xf32>
      %14 = vector.broadcast %13 : vector<1x128xf32> to vector<16x128xf32>
      %c0_12 = arith.constant 0 : index
      %c0_13 = arith.constant 0 : index
      %15 = vector.load %arg7[%c0_12, %c0_13] : memref<16x128xf32, #tpu.memory_space<vmem>>, vector<16x128xf32>
      tpu.vector_store %arg7[%c0_12, %c0_13], %14 {strides = array<i32>} : memref<16x128xf32, #tpu.memory_space<vmem>>, vector<16x128xf32>,
    } else {
    }
    %c0 = arith.constant 0 : index
    %c0_1 = arith.constant 0 : index
    %3 = vector.load %arg7[%c0, %c0_1] : memref<16x128xf32, #tpu.memory_space<vmem>>, vector<16x128xf32>
    %c0_2 = arith.constant 0 : index
    %c0_3 = arith.constant 0 : index
    %4 = vector.load %arg2[%c0_2, %c0_3] : memref<16x128xbf16, #tpu.memory_space<vmem>>, vector<16x128xbf16>
    %c0_4 = arith.constant 0 : index
    %c0_5 = arith.constant 0 : index
    %5 = vector.load %arg3[%c0_4, %c0_5] : memref<128x128xbf16, #tpu.memory_space<vmem>>, vector<128x128xbf16>
    %cst = arith.constant dense<0.000000e+00> : vector<16x128xf32>
    %6 = tpu.matmul %4, %5, %cst {dimension_numbers = #tpu.dot_dimension_numbers<[1], [0], [0], [1], [0, 0, 1, 1], [], []>} : vector<16x128xbf16>, vector<128x128xbf16>, vector<16x128xf32> -> vector<16x128xf32>
    %7 = arith.addf %3, %6 : vector<16x128xf32>
    %c0_6 = arith.constant 0 : index
    %c0_7 = arith.constant 0 : index
    %8 = vector.load %arg7[%c0_6, %c0_7] : memref<16x128xf32, #tpu.memory_space<vmem>>, vector<16x128xf32>
    tpu.vector_store %arg7[%c0_6, %c0_7], %7 {strides = array<i32>} : memref<16x128xf32, #tpu.memory_space<vmem>>, vector<16x128xf32>,
    %c0_i32_8 = arith.constant 0 : i32
    %9 = arith.cmpi eq, %arg1, %c0_i32_8 : i32
    %10 = arith.extui %9 : i1 to i32
    %c0_i32_9 = arith.constant 0 : i32
    %11 = arith.cmpi ne, %10, %c0_i32_9 : i32
    scf.if %11 {
      %c0_10 = arith.constant 0 : index
      %c0_11 = arith.constant 0 : index
      %12 = vector.load %arg7[%c0_10, %c0_11] : memref<16x128xf32, #tpu.memory_space<vmem>>, vector<16x128xf32>
      %cst_12 = arith.constant dense<0.000000e+00> : vector<16xf32>
      %13 = vector.multi_reduction <add>, %12, %cst_12 [1] : vector<16x128xf32> to vector<16xf32>
      %14 = vector.shape_cast %13 : vector<16xf32> to vector<16x1xf32>
      %cst_13 = arith.constant 3.125000e-02 : f32
      %15 = vector.broadcast %cst_13 : f32 to vector<16x1xf32>
      %16 = arith.mulf %14, %15 : vector<16x1xf32>
      %17 = arith.mulf %12, %12 : vector<16x128xf32>
      %cst_14 = arith.constant dense<0.000000e+00> : vector<16xf32>
      %18 = vector.multi_reduction <add>, %17, %cst_14 [1] : vector<16x128xf32> to vector<16xf32>
      %19 = vector.shape_cast %18 : vector<16xf32> to vector<16x1xf32>
      %cst_15 = arith.constant 3.125000e-02 : f32
      %20 = vector.broadcast %cst_15 : f32 to vector<16x1xf32>
      %21 = arith.mulf %19, %20 : vector<16x1xf32>
      %22 = arith.mulf %16, %16 : vector<16x1xf32>
      %23 = arith.subf %21, %22 : vector<16x1xf32>
      %cst_16 = arith.constant 0.000000e+00 : f32
      %24 = vector.broadcast %cst_16 : f32 to vector<16x1xf32>
      %25 = arith.maximumf %23, %24 : vector<16x1xf32>
      %26 = vector.broadcast %16 : vector<16x1xf32> to vector<16x128xf32>
      %27 = arith.subf %12, %26 : vector<16x128xf32>
      %cst_17 = arith.constant 9.99999974E-6 : f32
      %28 = vector.broadcast %cst_17 : f32 to vector<16x1xf32>
      %29 = arith.addf %25, %28 : vector<16x1xf32>
      %30 = math.rsqrt %29 : vector<16x1xf32>
      %31 = vector.broadcast %30 : vector<16x1xf32> to vector<16x128xf32>
      %32 = arith.mulf %27, %31 : vector<16x128xf32>
      %c0_18 = arith.constant 0 : index
      %c0_19 = arith.constant 0 : index
      %33 = vector.load %arg5[%c0_18, %c0_19] : memref<1x128xf32, #tpu.memory_space<vmem>>, vector<1x128xf32>
      %34 = vector.broadcast %33 : vector<1x128xf32> to vector<16x128xf32>
      %35 = arith.mulf %32, %34 : vector<16x128xf32>
      %c0_20 = arith.constant 0 : index
      %c0_21 = arith.constant 0 : index
      %36 = vector.load %arg6[%c0_20, %c0_21] : memref<1x128xf32, #tpu.memory_space<vmem>>, vector<1x128xf32>
      %37 = vector.broadcast %36 : vector<1x128xf32> to vector<16x128xf32>
      %38 = arith.addf %35, %37 : vector<16x128xf32>
      %cst_22 = arith.constant 0.000000e+00 : f32
      %39 = vector.broadcast %cst_22 : f32 to vector<16x128xf32>
      %40 = arith.maximumf %38, %39 : vector<16x128xf32>
      %c0_23 = arith.constant 0 : index
      %c0_24 = arith.constant 0 : index
      %41 = vector.load %arg7[%c0_23, %c0_24] : memref<16x128xf32, #tpu.memory_space<vmem>>, vector<16x128xf32>
      tpu.vector_store %arg7[%c0_23, %c0_24], %40 {strides = array<i32>} : memref<16x128xf32, #tpu.memory_space<vmem>>, vector<16x128xf32>,
    } else {
    }
    return
  }
  func.func @transform_0(%arg0: i32, %arg1: i32) -> (i32, i32) {
    %c0_i32 = arith.constant 0 : i32
    return %arg0, %arg1 : i32, i32
  }
  func.func @transform_1(%arg0: i32, %arg1: i32) -> (i32, i32) {
    %c0_i32 = arith.constant 0 : i32
    %c0_i32_0 = arith.constant 0 : i32
    return %arg1, %c0_i32 : i32, i32
  }
  func.func @transform_2(%arg0: i32, %arg1: i32) -> (i32, i32) {
    %c0_i32 = arith.constant 0 : i32
    %c0_i32_0 = arith.constant 0 : i32
    %c0_i32_1 = arith.constant 0 : i32
    return %c0_i32, %c0_i32_0 : i32, i32
  }
  func.func @transform_3(%arg0: i32, %arg1: i32) -> (i32, i32) {
    %c0_i32 = arith.constant 0 : i32
    %c0_i32_0 = arith.constant 0 : i32
    %c0_i32_1 = arith.constant 0 : i32
    return %c0_i32, %c0_i32_0 : i32, i32
  }
  func.func @transform_4(%arg0: i32, %arg1: i32) -> (i32, i32) {
    %c0_i32 = arith.constant 0 : i32
    %c0_i32_0 = arith.constant 0 : i32
    %c0_i32_1 = arith.constant 0 : i32
    return %c0_i32, %c0_i32_0 : i32, i32
  }
  func.func @transform_5(%arg0: i32, %arg1: i32) -> (i32, i32) {
    %c0_i32 = arith.constant 0 : i32
    %c0_i32_0 = arith.constant 0 : i32
    return %arg0, %c0_i32 : i32, i32
  }
}

</mosaic_0001>

<llo_original>
// kernel: tpu_custom_call.1
$region0: #{tpu_custom_call.1}
  #allocation0 [shape = 'u32[]', space=smem, size = 0x4, offset = 0x4, fixed_abs, tag = 'smem constant byte address 0x4 - core index']
  #allocation1 [shape = 'u32[144,128]{1,0:T(1,128)}', space=vmem, size = 0x12000, scoped, tag = 'internal scratch']
  %s0 = inlined_call_operand.hbm [shape: bf16[8,128], index: 0, kind: input, shape index: {}]
  %s1 = inlined_call_operand.hbm [shape: bf16[128,128], index: 1, kind: input, shape index: {}]
  %s2 = inlined_call_operand.vmem [shape: f32[1,128], index: 2, kind: input, shape index: {}]
  %s3 = inlined_call_operand.vmem [shape: f32[1,128], index: 3, kind: input, shape index: {}]
  %s4 = inlined_call_operand.vmem [shape: f32[1,128], index: 4, kind: input, shape index: {}]
  %s5 = inlined_call_operand.hbm [shape: f32[8,128], index: 5, kind: output, shape index: {}]
  %s6 = sld [smem:[#allocation0]]
  $region46: #{tpu_custom_call.1} parent=0
    _
  %s8 = ssub.s32 1, %s6
  %s9 = scalar_select 0, %s8, %s6
  $region1: #{tpu_custom_call.1} parent=0
    #allocation2 [shape = 'u8[4096]{0}', space=vmem, size = 0x1000, scoped, tag = 'input window, operand 0, single buffered']
    #allocation3 [shape = 's32[1]{0}', space=sflag, size = 0x4, scoped, tag = 'scoped memory for tpu_custom_call.1']
    #allocation4 [shape = 's32[1]{0}', space=sflag, size = 0x4, scoped, tag = 'scoped memory for tpu_custom_call.1']
    #allocation5 [shape = 'u8[32768]{0}', space=vmem, size = 0x8000, scoped, tag = 'input window, operand 1, single buffered']
    #allocation6 [shape = 's32[1]{0}', space=sflag, size = 0x4, scoped, tag = 'scoped memory for tpu_custom_call.1']
    #allocation7 [shape = 'u8[8192]{0}', space=vmem, size = 0x2000, scoped, tag = 'output window, operand 0, single buffered']
    %10 = vsyncpa [#allocation3], 0
    %11 = vsyncpa [#allocation6], 0
    %12 = vsyncpa [#allocation4], 0
    // Predicated region
    $region2: #{tpu_custom_call.1} parent=1 // pred_check
      _
    $region3: #{tpu_custom_call.1} parent=1 // pred_check_branch
      %14 = sbr.rel (0) target = $region5
    $region4: #{tpu_custom_call.1} parent=1 // pred_region
      %s16 = ssub.s32 128, 64
      %17 = vsyncadd [#allocation3], %s16
      %s18 = sshll.u32 [#allocation2], 4
      %s19 = int_to_ptr.vmem [resolvable:$true] %s18
      %24 = dma.hbm_to_vmem [thread:$0]  %s0, 64, %s19, [#allocation3], 64, 64, 4
    $region5: #{tpu_custom_call.1} parent=1 // pred_fallthru
      _
    // Predicated region
    $region6: #{tpu_custom_call.1} parent=1 // pred_check
      _
    $region7: #{tpu_custom_call.1} parent=1 // pred_check_branch
      %26 = sbr.rel (0) target = $region9
    $region8: #{tpu_custom_call.1} parent=1 // pred_region
      %s28 = ssub.s32 1024, 1024
      %29 = vsyncadd [#allocation6], %s28
      %s30 = sshll.u32 [#allocation5], 4
      %s31 = int_to_ptr.vmem [resolvable:$true] %s30
      %36 = dma.hbm_to_vmem [thread:$0]  %s1, 1024, %s31, [#allocation6], 64, 64, 4
    $region9: #{tpu_custom_call.1} parent=1 // pred_fallthru
      _
    // Predicated region
    $region10: #{tpu_custom_call.1} parent=1 // pred_check
      _
    $region11: #{tpu_custom_call.1} parent=1 // pred_check_branch
      %38 = sbr.rel (0) target = $region13
    $region12: #{tpu_custom_call.1} parent=1 // pred_region
      _
    $region13: #{tpu_custom_call.1} parent=1 // pred_fallthru
      _
    // Predicated region
    $region14: #{tpu_custom_call.1} parent=1 // pred_check
      _
    $region15: #{tpu_custom_call.1} parent=1 // pred_check_branch
      %40 = sbr.rel (0) target = $region17
    $region16: #{tpu_custom_call.1} parent=1 // pred_region
      _
    $region17: #{tpu_custom_call.1} parent=1 // pred_fallthru
      _
    // Predicated region
    $region18: #{tpu_custom_call.1} parent=1 // pred_check
      _
    $region19: #{tpu_custom_call.1} parent=1 // pred_check_branch
      %42 = sbr.rel (0) target = $region21
    $region20: #{tpu_custom_call.1} parent=1 // pred_region
      _
    $region21: #{tpu_custom_call.1} parent=1 // pred_fallthru
      _
    // Predicated region
    $region22: #{tpu_custom_call.1} parent=1 // pred_check
      _
    $region23: #{tpu_custom_call.1} parent=1 // pred_check_branch
      %44 = sbr.rel (0) target = $region25
    $region24: #{tpu_custom_call.1} parent=1 // pred_region
      %45 = dma.done [#allocation3], 128
    $region25: #{tpu_custom_call.1} parent=1 // pred_fallthru
      _
    // Predicated region
    $region26: #{tpu_custom_call.1} parent=1 // pred_check
      _
    $region27: #{tpu_custom_call.1} parent=1 // pred_check_branch
      %47 = sbr.rel (0) target = $region29
    $region28: #{tpu_custom_call.1} parent=1 // pred_region
      %48 = dma.done [#allocation6], 1024
    $region29: #{tpu_custom_call.1} parent=1 // pred_fallthru
      _
    %p50 = scmp.eq.s32.totalorder 0, 0
    // Predicated region
    $region30: #{tpu_custom_call.1} parent=1 // pred_check
      %p51 = pneg %p50
    $region31: #{tpu_custom_call.1} parent=1 // pred_check_branch
      %53 = sbr.rel (%p51) target = $region33
    $region32: #{tpu_custom_call.1} parent=1 // pred_region
      %v54 = vld [vmem:[%s2] sm:$0x1]
      %v56 = vlaneseq
      %v57 = vshrl.u32 %v56, 7
      %v58 = vsub.s32 0, %v57
      %v59 = vrot.slane %v54, %v58
      %61 = vst [vmem:[#allocation7] sm:$0xff] %v59
      %62 = vst [vmem:[#allocation7 + $0x8] sm:$0xff] %v59
    $region33: #{tpu_custom_call.1} parent=1 // pred_fallthru
      _
    %v63 = vld [vmem:[#allocation7] sm:$0xff]
    %v64 = vld [vmem:[#allocation7 + $0x8] sm:$0xff]
    %v65 = vld [vmem:[#allocation2] sm:$0xf]
    %v66 = vld [vmem:[#allocation2 + $0x4] sm:$0xf]
    %v67 = vld [vmem:[#allocation5] sm:$0xf]
    %v68 = vld [vmem:[#allocation5 + $0x4] sm:$0xf]
    %v69 = vld [vmem:[#allocation5 + $0x8] sm:$0xf]
    %v70 = vld [vmem:[#allocation5 + $0xc] sm:$0xf]
    %v71 = vld [vmem:[#allocation5 + $0x10] sm:$0xf]
    %v72 = vld [vmem:[#allocation5 + $0x14] sm:$0xf]
    %v73 = vld [vmem:[#allocation5 + $0x18] sm:$0xf]
    %v74 = vld [vmem:[#allocation5 + $0x1c] sm:$0xf]
    %v75 = vld [vmem:[#allocation5 + $0x20] sm:$0xf]
    %v76 = vld [vmem:[#allocation5 + $0x24] sm:$0xf]
    %v77 = vld [vmem:[#allocation5 + $0x28] sm:$0xf]
    %v78 = vld [vmem:[#allocation5 + $0x2c] sm:$0xf]
    %v79 = vld [vmem:[#allocation5 + $0x30] sm:$0xf]
    %v80 = vld [vmem:[#allocation5 + $0x34] sm:$0xf]
    %v81 = vld [vmem:[#allocation5 + $0x38] sm:$0xf]
    %v82 = vld [vmem:[#allocation5 + $0x3c] sm:$0xf]
    %v85 = vunpack.c.l.b16 %v65
    %v86 = vunpack.c.l.b16 %v66
    %v87 = vpack.c.b16 %v86, %v85
    %v105 = vunpack.c.l.b16 %v67
    %v106 = vunpack.c.l.b16 %v68
    %v107 = vunpack.c.l.b16 %v69
    %v108 = vunpack.c.l.b16 %v70
    %v109 = vunpack.c.l.b16 %v71
    %v110 = vunpack.c.l.b16 %v72
    %v111 = vunpack.c.l.b16 %v73
    %v112 = vunpack.c.l.b16 %v74
    %v113 = vunpack.c.l.b16 %v75
    %v114 = vunpack.c.l.b16 %v76
    %v115 = vunpack.c.l.b16 %v77
    %v116 = vunpack.c.l.b16 %v78
    %v117 = vunpack.c.l.b16 %v79
    %v118 = vunpack.c.l.b16 %v80
    %v119 = vunpack.c.l.b16 %v81
    %v120 = vunpack.c.l.b16 %v82
    %v121 = vpack.c.b16 %v106, %v105
    %v122 = vpack.c.b16 %v108, %v107
    %v123 = vpack.c.b16 %v110, %v109
    %v124 = vpack.c.b16 %v112, %v111
    %v125 = vpack.c.b16 %v114, %v113
    %v126 = vpack.c.b16 %v116, %v115
    %v127 = vpack.c.b16 %v118, %v117
    %v128 = vpack.c.b16 %v120, %v119
    %137 = vmatprep.subr.bf16.mxu0 0
    %138 = vmatpush1.bf16.msra.mxu0 %v121
    %139 = vmatprep.subr.bf16.mxu0 0
    %140 = vmatpush1.bf16.msra.mxu0 %v122
    %141 = vmatprep.subr.bf16.mxu0 0
    %142 = vmatpush1.bf16.msra.mxu0 %v123
    %143 = vmatprep.subr.bf16.mxu0 0
    %144 = vmatpush1.bf16.msra.mxu0 %v124
    %145 = vmatprep.subr.bf16.mxu0 0
    %146 = vmatpush1.bf16.msra.mxu0 %v125
    %147 = vmatprep.subr.bf16.mxu0 0
    %148 = vmatpush1.bf16.msra.mxu0 %v126
    %149 = vmatprep.subr.bf16.mxu0 0
    %150 = vmatpush1.bf16.msra.mxu0 %v127
    %151 = vmatprep.subr.bf16.mxu0 0
    %152 = vmatpush1.bf16.msra.mxu0 %v128
    %153 = vmatprep.subr.bf16.mxu0 0
    %154 = vmatpush1.bf16.msra.mxu0 0
    %155 = vmatprep.subr.bf16.mxu0 0
    %156 = vmatpush1.bf16.msra.mxu0 0
    %157 = vmatprep.subr.bf16.mxu0 0
    %158 = vmatpush1.bf16.msra.mxu0 0
    %159 = vmatprep.subr.bf16.mxu0 0
    %160 = vmatpush1.bf16.msra.mxu0 0
    %161 = vmatprep.subr.bf16.mxu0 0
    %162 = vmatpush1.bf16.msra.mxu0 0
    %163 = vmatprep.subr.bf16.mxu0 0
    %164 = vmatpush1.bf16.msra.mxu0 0
    %165 = vmatprep.subr.bf16.mxu0 0
    %166 = vmatpush1.bf16.msra.mxu0 0
    %167 = vmatprep.subr.bf16.mxu0 0
    %168 = vmatpush1.bf16.msra.mxu0 0
    %169 = vmatprep.mubr.bf16.mxu0 0
    %170 = vmatmul.mubr.bf16.gmra.mrb[0].mxu0 %v87
    %v171 = vpop.f32.mrb[0].mxu0
    %v172 = vadd.f32 0.0, %v171
    %v173 = vpop.f32.mrb[0].mxu0
    %v174 = vpop.f32.mrb[0].mxu0
    %v175 = vadd.f32 0.0, %v174
    %v176 = vpop.f32.mrb[0].mxu0
    %177 = vdwg.mxu0
    %v178 = vadd.f32 %v63, %v172
    %v179 = vadd.f32 %v64, %v175
    %180 = vst [vmem:[#allocation7] sm:$0xff] %v178
    %181 = vst [vmem:[#allocation7 + $0x8] sm:$0xff] %v179
    // Predicated region
    $region34: #{tpu_custom_call.1} parent=1 // pred_check
      %p182 = pneg %p50
    $region35: #{tpu_custom_call.1} parent=1 // pred_check_branch
      %184 = sbr.rel (%p182) target = $region37
    $region36: #{tpu_custom_call.1} parent=1 // pred_region
      %v185 = vld [vmem:[#allocation7] sm:$0xff]
      %v186 = vld [vmem:[#allocation7 + $0x8] sm:$0xff]
      %187 = vadd.xlane.f32.xlu0 %v185
      %v188 = vpop.xlane.xlu0 %187
      %189 = vadd.xlane.f32.xlu0 %v186
      %v190 = vpop.xlane.xlu0 %189
      %v191 = vmul.f32 %v188, 0.03125
      %v192 = vmul.f32 %v190, 0.03125
      %v193 = vmul.f32 %v185, %v185
      %v194 = vmul.f32 %v186, %v186
      %195 = vadd.xlane.f32.xlu0 %v193
      %v196 = vpop.xlane.xlu0 %195
      %197 = vadd.xlane.f32.xlu0 %v194
      %v198 = vpop.xlane.xlu0 %197
      %v199 = vmul.f32 %v196, 0.03125
      %v200 = vmul.f32 %v198, 0.03125
      %v201 = vmul.f32 %v191, %v191
      %v202 = vmul.f32 %v192, %v192
      %v203 = vsub.f32 %v199, %v201
      %v204 = vsub.f32 %v200, %v202
      %v205 = vmax.f32 %v203, 0.0
      %v206 = vmax.f32 %v204, 0.0
      %v207 = vsub.f32 %v185, %v191
      %v208 = vsub.f32 %v186, %v192
      %v209 = vadd.f32 %v205, 1e-05
      %v210 = vadd.f32 %v206, 1e-05
      %v211 = vrsqrt.pop %v209
      %v212 = vrsqrt.pop %v210
      %v213 = vmul.f32 %v207, %v211
      %v214 = vmul.f32 %v208, %v212
      %v215 = vld [vmem:[%s3] sm:$0x1]
      %v217 = vlaneseq
      %v218 = vshrl.u32 %v217, 7
      %v219 = vsub.s32 0, %v218
      %v220 = vrot.slane %v215, %v219
      %v222 = vmul.f32 %v213, %v220
      %v223 = vmul.f32 %v214, %v220
      %v224 = vld [vmem:[%s4] sm:$0x1]
      %v226 = vlaneseq
      %v227 = vshrl.u32 %v226, 7
      %v228 = vsub.s32 0, %v227
      %v229 = vrot.slane %v224, %v228
      %v231 = vadd.f32 %v222, %v229
      %v232 = vadd.f32 %v223, %v229
      %v233 = vmax.f32 %v231, 0.0
      %v234 = vmax.f32 %v232, 0.0
      %235 = vst [vmem:[#allocation7] sm:$0xff] %v233
      %236 = vst [vmem:[#allocation7 + $0x8] sm:$0xff] %v234
    $region37: #{tpu_custom_call.1} parent=1 // pred_fallthru
      _
    // Predicated region
    $region38: #{tpu_custom_call.1} parent=1 // pred_check
      _
    $region39: #{tpu_custom_call.1} parent=1 // pred_check_branch
      %238 = sbr.rel (0) target = $region41
    $region40: #{tpu_custom_call.1} parent=1 // pred_region
      %s240 = ssub.s32 256, 128
      %241 = vsyncadd [#allocation4], %s240
      %s242 = sshll.u32 [#allocation7], 4
      %s243 = int_to_ptr.vmem [resolvable:$true] %s242
      %248 = dma.vmem_to_hbm [thread:$0]  %s243, 128, %s5, [#allocation4], 128, 128, 8
    $region41: #{tpu_custom_call.1} parent=1 // pred_fallthru
      _
    // Predicated region
    $region42: #{tpu_custom_call.1} parent=1 // pred_check
      _
    $region43: #{tpu_custom_call.1} parent=1 // pred_check_branch
      %250 = sbr.rel (0) target = $region45
    $region44: #{tpu_custom_call.1} parent=1 // pred_region
      %251 = dma.done [#allocation4], 256
    $region45: #{tpu_custom_call.1} parent=1 // pred_fallthru
      _
    %252 = vsyncpa [#allocation3], 1
    %253 = vsyncpa [#allocation6], 1
    %254 = vsyncpa [#allocation4], 1

// kernel: tpu_custom_call.1
$region0: #{tpu_custom_call.1}
  #allocation0 [shape = 'u32[]', space=smem, size = 0x4, offset = 0x4, fixed_abs, tag = 'smem constant byte address 0x4 - core index']
  #allocation1 [shape = 'u32[144,128]{1,0:T(1,128)}', space=vmem, size = 0x12000, scoped, tag = 'internal scratch']
  %s0 = inlined_call_operand.hbm [shape: bf16[8,128], index: 0, kind: input, shape index: {}]
  %s1 = inlined_call_operand.hbm [shape: bf16[128,128], index: 1, kind: input, shape index: {}]
  %s2 = inlined_call_operand.vmem [shape: f32[1,128], index: 2, kind: input, shape index: {}]
  %s3 = inlined_call_operand.vmem [shape: f32[1,128], index: 3, kind: input, shape index: {}]
  %s4 = inlined_call_operand.vmem [shape: f32[1,128], index: 4, kind: input, shape index: {}]
  %s5 = inlined_call_operand.hbm [shape: f32[8,128], index: 5, kind: output, shape index: {}]
  %s6 = sld [smem:[#allocation0]]
  $region46: #{tpu_custom_call.1} parent=0
    _
  %s8 = ssub.s32 1, %s6
  %s9 = scalar_select 0, %s8, %s6
  $region1: #{tpu_custom_call.1} parent=0
    #allocation2 [shape = 'u8[4096]{0}', space=vmem, size = 0x1000, scoped, tag = 'input window, operand 0, single buffered']
    #allocation3 [shape = 's32[1]{0}', space=sflag, size = 0x4, scoped, tag = 'scoped memory for tpu_custom_call.1']
    #allocation4 [shape = 's32[1]{0}', space=sflag, size = 0x4, scoped, tag = 'scoped memory for tpu_custom_call.1']
    #allocation5 [shape = 'u8[32768]{0}', space=vmem, size = 0x8000, scoped, tag = 'input window, operand 1, single buffered']
    #allocation6 [shape = 's32[1]{0}', space=sflag, size = 0x4, scoped, tag = 'scoped memory for tpu_custom_call.1']
    #allocation7 [shape = 'u8[8192]{0}', space=vmem, size = 0x2000, scoped, tag = 'output window, operand 0, single buffered']
    %10 = vsyncpa [#allocation3], 0
    %11 = vsyncpa [#allocation6], 0
    %12 = vsyncpa [#allocation4], 0
    // Predicated region
    $region2: #{tpu_custom_call.1} parent=1 // pred_check
      _
    $region3: #{tpu_custom_call.1} parent=1 // pred_check_branch
      %14 = sbr.rel (0) target = $region5
    $region4: #{tpu_custom_call.1} parent=1 // pred_region
      %s16 = ssub.s32 128, 64
      %17 = vsyncadd [#allocation3], %s16
      %s18 = sshll.u32 [#allocation2], 4
      %s19 = int_to_ptr.vmem [resolvable:$true] %s18
      %24 = dma.hbm_to_vmem [thread:$0]  %s0, 64, %s19, [#allocation3], 64, 64, 4
    $region5: #{tpu_custom_call.1} parent=1 // pred_fallthru
      _
    // Predicated region
    $region6: #{tpu_custom_call.1} parent=1 // pred_check
      _
    $region7: #{tpu_custom_call.1} parent=1 // pred_check_branch
      %26 = sbr.rel (0) target = $region9
    $region8: #{tpu_custom_call.1} parent=1 // pred_region
      %s28 = ssub.s32 1024, 1024
      %29 = vsyncadd [#allocation6], %s28
      %s30 = sshll.u32 [#allocation5], 4
      %s31 = int_to_ptr.vmem [resolvable:$true] %s30
      %36 = dma.hbm_to_vmem [thread:$0]  %s1, 1024, %s31, [#allocation6], 64, 64, 4
    $region9: #{tpu_custom_call.1} parent=1 // pred_fallthru
      _
    // Predicated region
    $region10: #{tpu_custom_call.1} parent=1 // pred_check
      _
    $region11: #{tpu_custom_call.1} parent=1 // pred_check_branch
      %38 = sbr.rel (0) target = $region13
    $region12: #{tpu_custom_call.1} parent=1 // pred_region
      _
    $region13: #{tpu_custom_call.1} parent=1 // pred_fallthru
      _
    // Predicated region
    $region14: #{tpu_custom_call.1} parent=1 // pred_check
      _
    $region15: #{tpu_custom_call.1} parent=1 // pred_check_branch
      %40 = sbr.rel (0) target = $region17
    $region16: #{tpu_custom_call.1} parent=1 // pred_region
      _
    $region17: #{tpu_custom_call.1} parent=1 // pred_fallthru
      _
    // Predicated region
    $region18: #{tpu_custom_call.1} parent=1 // pred_check
      _
    $region19: #{tpu_custom_call.1} parent=1 // pred_check_branch
      %42 = sbr.rel (0) target = $region21
    $region20: #{tpu_custom_call.1} parent=1 // pred_region
      _
    $region21: #{tpu_custom_call.1} parent=1 // pred_fallthru
      _
    // Predicated region
    $region22: #{tpu_custom_call.1} parent=1 // pred_check
      _
    $region23: #{tpu_custom_call.1} parent=1 // pred_check_branch
      %44 = sbr.rel (0) target = $region25
    $region24: #{tpu_custom_call.1} parent=1 // pred_region
      %45 = dma.done [#allocation3], 128
    $region25: #{tpu_custom_call.1} parent=1 // pred_fallthru
      _
    // Predicated region
    $region26: #{tpu_custom_call.1} parent=1 // pred_check
      _
    $region27: #{tpu_custom_call.1} parent=1 // pred_check_branch
      %47 = sbr.rel (0) target = $region29
    $region28: #{tpu_custom_call.1} parent=1 // pred_region
      %48 = dma.done [#allocation6], 1024
    $region29: #{tpu_custom_call.1} parent=1 // pred_fallthru
      _
    %p50 = scmp.eq.s32.totalorder 0, 0
    // Predicated region
    $region30: #{tpu_custom_call.1} parent=1 // pred_check
      %p51 = pneg %p50
    $region31: #{tpu_custom_call.1} parent=1 // pred_check_branch
      %53 = sbr.rel (%p51) target = $region33
    $region32: #{tpu_custom_call.1} parent=1 // pred_region
      %v54 = vld [vmem:[%s2] sm:$0x1]
      %v56 = vlaneseq
      %v57 = vshrl.u32 %v56, 7
      %v58 = vsub.s32 0, %v57
      %v59 = vrot.slane %v54, %v58
      %61 = vst [vmem:[#allocation7] sm:$0xff] %v59
      %62 = vst [vmem:[#allocation7 + $0x8] sm:$0xff] %v59
    $region33: #{tpu_custom_call.1} parent=1 // pred_fallthru
      _
    %v63 = vld [vmem:[#allocation7] sm:$0xff]
    %v64 = vld [vmem:[#allocation7 + $0x8] sm:$0xff]
    %v65 = vld [vmem:[#allocation2] sm:$0xf]
    %v66 = vld [vmem:[#allocation2 + $0x4] sm:$0xf]
    %v67 = vld [vmem:[#allocation5] sm:$0xf]
    %v68 = vld [vmem:[#allocation5 + $0x4] sm:$0xf]
    %v69 = vld [vmem:[#allocation5 + $0x8] sm:$0xf]
    %v70 = vld [vmem:[#allocation5 + $0xc] sm:$0xf]
    %v71 = vld [vmem:[#allocation5 + $0x10] sm:$0xf]
    %v72 = vld [vmem:[#allocation5 + $0x14] sm:$0xf]
    %v73 = vld [vmem:[#allocation5 + $0x18] sm:$0xf]
    %v74 = vld [vmem:[#allocation5 + $0x1c] sm:$0xf]
    %v75 = vld [vmem:[#allocation5 + $0x20] sm:$0xf]
    %v76 = vld [vmem:[#allocation5 + $0x24] sm:$0xf]
    %v77 = vld [vmem:[#allocation5 + $0x28] sm:$0xf]
    %v78 = vld [vmem:[#allocation5 + $0x2c] sm:$0xf]
    %v79 = vld [vmem:[#allocation5 + $0x30] sm:$0xf]
    %v80 = vld [vmem:[#allocation5 + $0x34] sm:$0xf]
    %v81 = vld [vmem:[#allocation5 + $0x38] sm:$0xf]
    %v82 = vld [vmem:[#allocation5 + $0x3c] sm:$0xf]
    %v85 = vunpack.c.l.b16 %v65
    %v86 = vunpack.c.l.b16 %v66
    %v87 = vpack.c.b16 %v86, %v85
    %v105 = vunpack.c.l.b16 %v67
    %v106 = vunpack.c.l.b16 %v68
    %v107 = vunpack.c.l.b16 %v69
    %v108 = vunpack.c.l.b16 %v70
    %v109 = vunpack.c.l.b16 %v71
    %v110 = vunpack.c.l.b16 %v72
    %v111 = vunpack.c.l.b16 %v73
    %v112 = vunpack.c.l.b16 %v74
    %v113 = vunpack.c.l.b16 %v75
    %v114 = vunpack.c.l.b16 %v76
    %v115 = vunpack.c.l.b16 %v77
    %v116 = vunpack.c.l.b16 %v78
    %v117 = vunpack.c.l.b16 %v79
    %v118 = vunpack.c.l.b16 %v80
    %v119 = vunpack.c.l.b16 %v81
    %v120 = vunpack.c.l.b16 %v82
    %v121 = vpack.c.b16 %v106, %v105
    %v122 = vpack.c.b16 %v108, %v107
    %v123 = vpack.c.b16 %v110, %v109
    %v124 = vpack.c.b16 %v112, %v111
    %v125 = vpack.c.b16 %v114, %v113
    %v126 = vpack.c.b16 %v116, %v115
    %v127 = vpack.c.b16 %v118, %v117
    %v128 = vpack.c.b16 %v120, %v119
    %137 = vmatprep.subr.bf16.mxu0 0
    %138 = vmatpush1.bf16.msra.mxu0 %v121
    %139 = vmatprep.subr.bf16.mxu0 0
    %140 = vmatpush1.bf16.msra.mxu0 %v122
    %141 = vmatprep.subr.bf16.mxu0 0
    %142 = vmatpush1.bf16.msra.mxu0 %v123
    %143 = vmatprep.subr.bf16.mxu0 0
    %144 = vmatpush1.bf16.msra.mxu0 %v124
    %145 = vmatprep.subr.bf16.mxu0 0
    %146 = vmatpush1.bf16.msra.mxu0 %v125
    %147 = vmatprep.subr.bf16.mxu0 0
    %148 = vmatpush1.bf16.msra.mxu0 %v126
    %149 = vmatprep.subr.bf16.mxu0 0
    %150 = vmatpush1.bf16.msra.mxu0 %v127
    %151 = vmatprep.subr.bf16.mxu0 0
    %152 = vmatpush1.bf16.msra.mxu0 %v128
    %153 = vmatprep.subr.bf16.mxu0 0
    %154 = vmatpush1.bf16.msra.mxu0 0
    %155 = vmatprep.subr.bf16.mxu0 0
    %156 = vmatpush1.bf16.msra.mxu0 0
    %157 = vmatprep.subr.bf16.mxu0 0
    %158 = vmatpush1.bf16.msra.mxu0 0
    %159 = vmatprep.subr.bf16.mxu0 0
    %160 = vmatpush1.bf16.msra.mxu0 0
    %161 = vmatprep.subr.bf16.mxu0 0
    %162 = vmatpush1.bf16.msra.mxu0 0
    %163 = vmatprep.subr.bf16.mxu0 0
    %164 = vmatpush1.bf16.msra.mxu0 0
    %165 = vmatprep.subr.bf16.mxu0 0
    %166 = vmatpush1.bf16.msra.mxu0 0
    %167 = vmatprep.subr.bf16.mxu0 0
    %168 = vmatpush1.bf16.msra.mxu0 0
    %169 = vmatprep.mubr.bf16.mxu0 0
    %170 = vmatmul.mubr.bf16.gmra.mrb[0].mxu0 %v87
    %v171 = vpop.f32.mrb[0].mxu0
    %v172 = vadd.f32 0.0, %v171
    %v173 = vpop.f32.mrb[0].mxu0
    %v174 = vpop.f32.mrb[0].mxu0
    %v175 = vadd.f32 0.0, %v174
    %v176 = vpop.f32.mrb[0].mxu0
    %177 = vdwg.mxu0
    %v178 = vadd.f32 %v63, %v172
    %v179 = vadd.f32 %v64, %v175
    %180 = vst [vmem:[#allocation7] sm:$0xff] %v178
    %181 = vst [vmem:[#allocation7 + $0x8] sm:$0xff] %v179
    // Predicated region
    $region34: #{tpu_custom_call.1} parent=1 // pred_check
      %p182 = pneg %p50
    $region35: #{tpu_custom_call.1} parent=1 // pred_check_branch
      %184 = sbr.rel (%p182) target = $region37
    $region36: #{tpu_custom_call.1} parent=1 // pred_region
      %v185 = vld [vmem:[#allocation7] sm:$0xff]
      %v186 = vld [vmem:[#allocation7 + $0x8] sm:$0xff]
      %187 = vadd.xlane.f32.xlu0 %v185
      %v188 = vpop.xlane.xlu0 %187
      %189 = vadd.xlane.f32.xlu0 %v186
      %v190 = vpop.xlane.xlu0 %189
      %v191 = vmul.f32 %v188, 0.03125
      %v192 = vmul.f32 %v190, 0.03125
      %v193 = vmul.f32 %v185, %v185
      %v194 = vmul.f32 %v186, %v186
      %195 = vadd.xlane.f32.xlu0 %v193
      %v196 = vpop.xlane.xlu0 %195
      %197 = vadd.xlane.f32.xlu0 %v194
      %v198 = vpop.xlane.xlu0 %197
      %v199 = vmul.f32 %v196, 0.03125
      %v200 = vmul.f32 %v198, 0.03125
      %v201 = vmul.f32 %v191, %v191
      %v202 = vmul.f32 %v192, %v192
      %v203 = vsub.f32 %v199, %v201
      %v204 = vsub.f32 %v200, %v202
      %v205 = vmax.f32 %v203, 0.0
      %v206 = vmax.f32 %v204, 0.0
      %v207 = vsub.f32 %v185, %v191
      %v208 = vsub.f32 %v186, %v192
      %v209 = vadd.f32 %v205, 1e-05
      %v210 = vadd.f32 %v206, 1e-05
      %v211 = vrsqrt.pop %v209
      %v212 = vrsqrt.pop %v210
      %v213 = vmul.f32 %v207, %v211
      %v214 = vmul.f32 %v208, %v212
      %v215 = vld [vmem:[%s3] sm:$0x1]
      %v217 = vlaneseq
      %v218 = vshrl.u32 %v217, 7
      %v219 = vsub.s32 0, %v218
      %v220 = vrot.slane %v215, %v219
      %v222 = vmul.f32 %v213, %v220
      %v223 = vmul.f32 %v214, %v220
      %v224 = vld [vmem:[%s4] sm:$0x1]
      %v226 = vlaneseq
      %v227 = vshrl.u32 %v226, 7
      %v228 = vsub.s32 0, %v227
      %v229 = vrot.slane %v224, %v228
      %v231 = vadd.f32 %v222, %v229
      %v232 = vadd.f32 %v223, %v229
      %v233 = vmax.f32 %v231, 0.0
      %v234 = vmax.f32 %v232, 0.0
      %235 = vst [vmem:[#allocation7] sm:$0xff] %v233
      %236 = vst [vmem:[#allocation7 + $0x8] sm:$0xff] %v234
    $region37: #{tpu_custom_call.1} parent=1 // pred_fallthru
      _
    // Predicated region
    $region38: #{tpu_custom_call.1} parent=1 // pred_check
      _
    $region39: #{tpu_custom_call.1} parent=1 // pred_check_branch
      %238 = sbr.rel (0) target = $region41
    $region40: #{tpu_custom_call.1} parent=1 // pred_region
      %s240 = ssub.s32 256, 128
      %241 = vsyncadd [#allocation4], %s240
      %s242 = sshll.u32 [#allocation7], 4
      %s243 = int_to_ptr.vmem [resolvable:$true] %s242
      %248 = dma.vmem_to_hbm [thread:$0]  %s243, 128, %s5, [#allocation4], 128, 128, 8
    $region41: #{tpu_custom_call.1} parent=1 // pred_fallthru
      _
    // Predicated region
    $region42: #{tpu_custom_call.1} parent=1 // pred_check
      _
    $region43: #{tpu_custom_call.1} parent=1 // pred_check_branch
      %250 = sbr.rel (0) target = $region45
    $region44: #{tpu_custom_call.1} parent=1 // pred_region
      %251 = dma.done [#allocation4], 256
    $region45: #{tpu_custom_call.1} parent=1 // pred_fallthru
      _
    %252 = vsyncpa [#allocation3], 1
    %253 = vsyncpa [#allocation6], 1
    %254 = vsyncpa [#allocation4], 1

</llo_original>
